<compile_context>
chip_gen: v6e
topology: v6e:2x2x1
jax: 0.10.0
libtpu: 0.0.40
codegen_flags: <defaults>
</compile_context>

<pallas_src>
import functools
import numpy as np

import jax
import jax.numpy as jnp
from jax.experimental import pallas as pl
from jax.experimental.pallas import tpu as pltpu


_META_LANES = 128  # meta output: lane 0 = any-match flag, lane 1 = matched column index


def _round_up(x, m):
    return ((int(x) + m - 1) // m) * m


# --------------------------------------------------------------------------------------
# Fused per-image tracking kernel (grid iterates over the batch):
#   1) prev_track_ids vs track_ids:  any(dim=1)  +  matched column index
#   2) full pairwise IoU of all prev pred boxes (cxcywh -> xyxy fused, eps-safe)
#   3) per-row unbiased std + gaussian noise injection for hs embeddings
# --------------------------------------------------------------------------------------
def _fused_tracking_kernel(prev_ref, cur_ref,              # (1,P,1) int32 , (1,1,T) int32
                           boxes_ref, boxes_t_ref,         # (1,Q,4) f32   , (1,4,QL) f32
                           hs_ref, noise_ref,              # (1,Q,DL) f32  , (1,Q,DL) f32
                           meta_ref, iou_ref, hs_out_ref,  # outputs (all lane-dense)
                           *, noise_scale, d_valid):
    # ---- 1) track-id matching --------------------------------------------------------
    prev = prev_ref[0]                                     # (P, 1)  pad = -1
    cur = cur_ref[0]                                       # (1, T)  pad = -2
    m = prev == cur                                        # (P, T)
    any_col = jnp.max(m.astype(jnp.int32), axis=1, keepdims=True)       # (P, 1)
    cols = jax.lax.broadcasted_iota(jnp.int32, m.shape, 1)
    # NOTE: assumes unique track ids (matches torch nonzero()[:,1] under uniqueness).
    idx_col = jnp.max(jnp.where(m, cols, -1), axis=1, keepdims=True)    # (P, 1)
    p_sub, meta_l = meta_ref.shape[1], meta_ref.shape[2]
    lane = jax.lax.broadcasted_iota(jnp.int32, (p_sub, meta_l), 1)
    meta_ref[0] = jnp.where(lane == 0, any_col, jnp.where(lane == 1, idx_col, 0))

    # ---- 2) full pairwise IoU (cxcywh -> xyxy fused) -----------------------------------
    a = boxes_ref[0]                                       # (Q, 4)
    bt = boxes_t_ref[0]                                    # (4, QL), padded cols are zeros
    ax1 = a[:, 0:1] - 0.5 * a[:, 2:3]
    ay1 = a[:, 1:2] - 0.5 * a[:, 3:4]
    ax2 = a[:, 0:1] + 0.5 * a[:, 2:3]
    ay2 = a[:, 1:2] + 0.5 * a[:, 3:4]
    bx1 = bt[0:1, :] - 0.5 * bt[2:3, :]
    by1 = bt[1:2, :] - 0.5 * bt[3:4, :]
    bx2 = bt[0:1, :] + 0.5 * bt[2:3, :]
    by2 = bt[1:2, :] + 0.5 * bt[3:4, :]
    area_a = (ax2 - ax1) * (ay2 - ay1)                     # (Q, 1)
    area_b = (bx2 - bx1) * (by2 - by1)                     # (1, QL)
    inter = (jnp.maximum(jnp.minimum(ax2, bx2) - jnp.maximum(ax1, bx1), 0.0)
             * jnp.maximum(jnp.minimum(ay2, by2) - jnp.maximum(ay1, by1), 0.0))
    union = jnp.maximum(area_a + area_b - inter, 1e-7)     # eps: degenerate boxes -> IoU 0
    iou_ref[0] = inter * pl.reciprocal(union, approx=True)  # divide on EUP

    # ---- 3) hs + randn * std(dim=1, unbiased) * noise_scale ----------------------------
    hs = hs_ref[0]                                         # (Q, DL), lanes >= d_valid are pad
    if noise_scale > 0.0:
        lane_d = jax.lax.broadcasted_iota(jnp.int32, hs.shape, 1)
        valid = lane_d < d_valid
        mean = jnp.sum(jnp.where(valid, hs, 0.0), axis=1, keepdims=True) / float(d_valid)
        dev = jnp.where(valid, hs - mean, 0.0)
        var = jnp.sum(dev * dev, axis=1, keepdims=True) / float(max(d_valid - 1, 1))
        std = jnp.sqrt(var)                                # unbiased, == torch .std(dim=1)
        hs_out_ref[0] = hs + noise_ref[0] * std * noise_scale
    else:
        hs_out_ref[0] = hs


@functools.lru_cache(maxsize=None)
def _build_fused_call(B, Q, D, P_sub, T_lane, Q_sub, Q_lane, D_lane, noise_scale):
    kern = functools.partial(_fused_tracking_kernel,
                             noise_scale=float(noise_scale), d_valid=int(D))
    call = pl.pallas_call(
        kern,
        grid=(B,),
        in_specs=[
            pl.BlockSpec((1, P_sub, 1), lambda b: (b, 0, 0)),        # prev ids (column)
            pl.BlockSpec((1, 1, T_lane), lambda b: (b, 0, 0)),       # cur ids (lane row)
            pl.BlockSpec((1, Q_sub, 4), lambda b: (b, 0, 0)),        # boxes
            pl.BlockSpec((1, 4, Q_lane), lambda b: (b, 0, 0)),       # boxes transposed
            pl.BlockSpec((1, Q_sub, D_lane), lambda b: (b, 0, 0)),   # hs embeddings
            pl.BlockSpec((1, Q_sub, D_lane), lambda b: (b, 0, 0)),   # gaussian noise
        ],
        out_specs=(
            pl.BlockSpec((1, P_sub, _META_LANES), lambda b: (b, 0, 0)),
            pl.BlockSpec((1, Q_sub, Q_lane), lambda b: (b, 0, 0)),
            pl.BlockSpec((1, Q_sub, D_lane), lambda b: (b, 0, 0)),
        ),
        out_shape=(
            jax.ShapeDtypeStruct((B, P_sub, _META_LANES), jnp.int32),
            jax.ShapeDtypeStruct((B, Q_sub, Q_lane), jnp.float32),
            jax.ShapeDtypeStruct((B, Q_sub, D_lane), jnp.float32),
        ),
        compiler_params=pltpu.CompilerParams(
            dimension_semantics=("parallel",)),            # v7x: shard batch over the 2 TCs
    )

    def fn(noise_key, prev_ids, cur_ids, pred_boxes, hs_embed):
        # lane/sublane padding fused into the same XLA computation (no extra dispatches)
        boxes_pad = jnp.zeros((B, Q_sub, 4), jnp.float32).at[:, :Q, :].set(pred_boxes)
        boxes_t = jnp.zeros((B, 4, Q_lane), jnp.float32).at[:, :, :Q].set(
            jnp.swapaxes(pred_boxes, 1, 2))
        hs_pad = jnp.zeros((B, Q_sub, D_lane), jnp.float32).at[:, :Q, :D].set(hs_embed)
        if noise_scale > 0.0:
            noise = jax.random.normal(noise_key, (B, Q_sub, D_lane), jnp.float32)
        else:
            noise = jnp.zeros((B, Q_sub, D_lane), jnp.float32)
        return call(prev_ids, cur_ids, boxes_pad, boxes_t, hs_pad, noise)

    return jax.jit(fn)


def run_fused_tracking(prev_track_ids_list, track_ids_list, pred_boxes, hs_embed,
                       noise_key, noise_scale):
    """Single fused, statically-shaped Pallas call for the whole batch.

    Returns (meta, iou, hs_noised) device arrays:
      meta[b, p, 0] = any-match flag for prev track p, meta[b, p, 1] = matched column index
      iou[b, q, u]  = IoU(pred_box q, pred_box u)
      hs_noised[b, q, :D] = hs + N(0,1) * row_std * noise_scale
    """
    B, Q, _ = pred_boxes.shape
    D = int(hs_embed.shape[-1])
    P_sub = _round_up(max(Q, 8), 8)
    Q_sub = P_sub
    Q_lane = _round_up(max(Q, 128), 128)
    D_lane = _round_up(max(D, 128), 128)
    max_T = max([len(t) for t in track_ids_list] + [1])
    T_lane = _round_up(max(max_T, 128), 128)

    prev_ids = np.full((B, P_sub, 1), -1, np.int32)   # -1: never equals a real (>=0) id
    cur_ids = np.full((B, 1, T_lane), -2, np.int32)   # -2: never equals prev pad or real id
    for b in range(B):
        pi = np.asarray(prev_track_ids_list[b], np.int64)
        ti = np.asarray(track_ids_list[b], np.int64)
        assert len(pi) <= P_sub and len(ti) <= T_lane
        prev_ids[b, :len(pi), 0] = pi
        cur_ids[b, 0, :len(ti)] = ti

    fused = _build_fused_call(int(B), int(Q), D, P_sub, T_lane, Q_sub, Q_lane,
                              D_lane, float(noise_scale))
    return fused(noise_key, prev_ids, cur_ids, pred_boxes, hs_embed)


# --------------------------------------------------------------------------------------
# DETRTrackingBase (JAX / Pallas version)
# --------------------------------------------------------------------------------------
class DETRTrackingBase:
    def __init__(self, num_queries=8, hidden_dim=32,
                 track_query_false_positive_prob=0.0,
                 track_query_false_negative_prob=0.0,
                 track_query_noise=0.0, seed=0):
        self.num_queries = num_queries
        self.hidden_dim = hidden_dim
        self._track_query_false_positive_prob = track_query_false_positive_prob
        self._track_query_false_negative_prob = track_query_false_negative_prob
        self._track_query_noise = track_query_noise
        self._tracking = False
        # deterministic stand-ins for python `random` / torch RNG
        self._rng = np.random.default_rng(seed)
        self._key = jax.random.PRNGKey(seed)

    def train(self, mode=True):
        self._tracking = False
        return self

    def tracking(self):
        self._tracking = True

    # ---- stand-ins for functionality owned by the DETR base class / matcher ----------
    def _base_forward(self, images, key):
        # TODO(synk): the real DETR backbone + transformer (super().forward) is not part of
        # this module; synthesize deterministic pred_boxes / hs_embed instead.
        B = images.shape[0]
        k1, k2 = jax.random.split(key)
        pred_boxes = jax.nn.sigmoid(
            jax.random.normal(k1, (B, self.num_queries, 4), jnp.float32))
        hs_embed = jax.random.normal(k2, (B, self.num_queries, self.hidden_dim), jnp.float32)
        return {"pred_boxes": pred_boxes, "hs_embed": hs_embed}

    def _matcher(self, prev_outputs, prev_targets):
        # TODO(synk): Hungarian matching is host-side combinatorial optimisation; identity
        # matching is used as a deterministic stand-in.
        return [(np.arange(len(t["track_ids"]), dtype=np.int64),
                 np.arange(len(t["track_ids"]), dtype=np.int64)) for t in prev_targets]

    # -----------------------------------------------------------------------------------
    def forward(self, samples, targets=None):
        if targets is not None and not self._tracking and len(targets) > 0:
            self._key, k_prev, k_noise = jax.random.split(self._key, 3)
            prev_images = jnp.stack([t["prev_image"] for t in targets], axis=0)
            prev_out = self._base_forward(prev_images, k_prev)
            prev_targets = [{k.replace("prev_", ""): v for k, v in t.items() if "prev" in k}
                            for t in targets]
            prev_indices = self._matcher(prev_out, prev_targets)

            B = len(targets)
            Q = self.num_queries
            D = self.hidden_dim

            # ---- host pass 1: false-negative subsampling + gather track ids (host RNG) ----
            prev_out_ind_list, prev_track_ids_list, track_ids_list = [], [], []
            for target, (prev_out_ind, prev_target_ind) in zip(targets, prev_indices):
                prev_out_ind = np.asarray(prev_out_ind)
                prev_target_ind = np.asarray(prev_target_ind)
                if self._track_query_false_negative_prob:
                    keep = (self._rng.uniform(size=len(prev_target_ind))
                            >= self._track_query_false_negative_prob)
                    prev_out_ind = prev_out_ind[keep]
                    prev_target_ind = prev_target_ind[keep]
                prev_out_ind_list.append([int(x) for x in prev_out_ind])
                prev_track_ids_list.append(
                    np.asarray(target["prev_track_ids"])[prev_target_ind].astype(np.int64))
                track_ids_list.append(np.asarray(target["track_ids"]).astype(np.int64))

            # ---- one fused Pallas call for the whole batch --------------------------------
            meta_dev, iou_dev, hs_noised_dev = run_fused_tracking(
                prev_track_ids_list, track_ids_list,
                prev_out["pred_boxes"], prev_out["hs_embed"],
                k_noise, self._track_query_noise)

            # one batched device->host transfer for everything the host logic consumes
            meta_np, iou_np, hs_noised_np, boxes_np, hs_np = jax.device_get(
                (meta_dev, iou_dev, hs_noised_dev,
                 prev_out["pred_boxes"], prev_out["hs_embed"]))

            # ---- host pass 2: false positives, masks, row selection (pure numpy) ----------
            for i, target in enumerate(targets):
                prev_out_ind = list(prev_out_ind_list[i])
                P = len(prev_out_ind)
                any_m = meta_np[i, :P, 0] > 0
                matched_idx = meta_np[i, :P, 1]
                target["track_query_match_ids"] = jnp.asarray(matched_idx[any_m], jnp.int32)

                used = set(prev_out_ind)
                not_prev_out_ind = [q for q in range(Q) if q not in used]
                matched_out_ind = [prev_out_ind[k] for k in range(P) if any_m[k]]

                # false positives: IoU-weighted sampling of unmatched prev boxes (host RNG,
                # IoU rows come from the precomputed full matrix -> no per-box kernel/sync)
                random_false_out_ind = []
                for j in matched_out_ind:
                    if self._rng.uniform() < self._track_query_false_positive_prob:
                        if not_prev_out_ind:
                            box_weights = iou_np[i, j, not_prev_out_ind]
                            if (box_weights > 0.0).any():
                                p = box_weights / box_weights.sum()
                                choice = int(self._rng.choice(len(not_prev_out_ind), p=p))
                                random_false_out_ind.append(not_prev_out_ind.pop(choice))

                all_out_ind = prev_out_ind + random_false_out_ind
                matching_ext = np.concatenate(
                    [any_m, np.zeros(len(random_false_out_ind), dtype=bool)])

                # 1 / -1 / 0 mask, padded with num_queries zeros (plain numpy)
                mask = np.zeros(len(all_out_ind) + Q, np.float32)
                mask[:len(all_out_ind)] = np.where(matching_ext, 1.0, -1.0)
                target["track_queries_match_mask"] = jnp.asarray(mask)

                sel = np.asarray(all_out_ind, np.int64)
                # Guard equivalent to `not torch.isnan(hs_embeds.std()).any()` for finite
                # inputs: std over >= 2 elements of finite data is never NaN.
                use_noise = bool(self._track_query_noise) and sel.size * D >= 2
                hs_sel = hs_noised_np[i, sel, :D] if use_noise else hs_np[i, sel, :]
                target["track_query_hs_embeds"] = jnp.asarray(hs_sel, jnp.float32)
                target["track_query_boxes"] = jnp.asarray(boxes_np[i, sel, :], jnp.float32)

        self._key, k_cur = jax.random.split(self._key)
        out = self._base_forward(samples, k_cur)
        # TODO(synk): features / memory / hs come from the DETR base class forward.
        features, memory, hs = None, None, None
        return out, targets, features, memory, hs


# --------------------------------------------------------------------------------------
def _numpy_iou_cxcywh(a, b):
    ax1 = a[:, 0] - 0.5 * a[:, 2]; ay1 = a[:, 1] - 0.5 * a[:, 3]
    ax2 = a[:, 0] + 0.5 * a[:, 2]; ay2 = a[:, 1] + 0.5 * a[:, 3]
    bx1 = b[:, 0] - 0.5 * b[:, 2]; by1 = b[:, 1] - 0.5 * b[:, 3]
    bx2 = b[:, 0] + 0.5 * b[:, 2]; by2 = b[:, 1] + 0.5 * b[:, 3]
    area_a = (ax2 - ax1) * (ay2 - ay1)
    area_b = (bx2 - bx1) * (by2 - by1)
    ix = np.maximum(np.minimum(ax2[:, None], bx2[None]) - np.maximum(ax1[:, None], bx1[None]), 0)
    iy = np.maximum(np.minimum(ay2[:, None], by2[None]) - np.maximum(ay1[:, None], by1[None]), 0)
    inter = ix * iy
    union = np.maximum(area_a[:, None] + area_b[None] - inter, 1e-7)
    return inter / union


if __name__ == "__main__":
    key = jax.random.PRNGKey(0)
    B, C, H, W = 2, 4, 16, 16
    NQ, HID = 8, 32
    k_img, k_prev_img, k_chk = jax.random.split(key, 3)
    samples = jax.random.normal(k_img, (B, C, H, W), jnp.float32)
    prev_images = jax.random.normal(k_prev_img, (B, C, H, W), jnp.float32)

    # ---- correctness spot-check of the fused kernel against a numpy reference ----------
    kb, kh, kn = jax.random.split(k_chk, 3)
    chk_boxes = jax.nn.sigmoid(jax.random.normal(kb, (B, NQ, 4), jnp.float32))
    chk_hs = jax.random.normal(kh, (B, NQ, HID), jnp.float32)
    chk_prev = [np.array([1, 2, 3, 9], np.int64), np.array([7], np.int64)]
    chk_cur = [np.array([3, 4, 1], np.int64), np.array([8, 7], np.int64)]
    meta_d, iou_d, hs_d = run_fused_tracking(chk_prev, chk_cur, chk_boxes, chk_hs, kn, 0.1)
    jax.block_until_ready((meta_d, iou_d, hs_d))
    meta_h, iou_h, boxes_h = jax.device_get((meta_d, iou_d, chk_boxes))
    for b in range(B):
        pm = chk_prev[b][:, None] == chk_cur[b][None, :]
        np.testing.assert_array_equal(meta_h[b, :len(chk_prev[b]), 0],
                                      pm.any(1).astype(np.int32))
        np.testing.assert_array_equal(meta_h[b, :len(chk_prev[b]), 1],
                                      np.where(pm.any(1), pm.argmax(1), -1))
        np.testing.assert_allclose(iou_h[b, :NQ, :NQ],
                                   _numpy_iou_cxcywh(boxes_h[b], boxes_h[b]),
                                   rtol=5e-3, atol=5e-3)

    # ---- full forward pass --------------------------------------------------------------
    targets = [
        {"prev_image": prev_images[0],
         "prev_track_ids": np.array([1, 2, 3, 4, 5, 6], np.int64),
         "track_ids": np.array([3, 4, 5, 6, 7, 8], np.int64)},
        {"prev_image": prev_images[1],
         "prev_track_ids": np.array([10, 11, 12, 13, 14, 15], np.int64),
         "track_ids": np.array([12, 13, 14, 20, 21, 22], np.int64)},
    ]

    model = DETRTrackingBase(num_queries=NQ, hidden_dim=HID,
                             track_query_false_positive_prob=0.5,
                             track_query_false_negative_prob=0.2,
                             track_query_noise=0.1, seed=0)
    model.train()
    out, targets, _, _, _ = model.forward(samples, targets)

    for t in targets:
        jax.block_until_ready(t["track_query_hs_embeds"])
        jax.block_until_ready(t["track_queries_match_mask"])
        jax.block_until_ready(t["track_query_match_ids"])
        jax.block_until_ready(t["track_query_boxes"])
    jax.block_until_ready(out["pred_boxes"])
    print("KERNEL_OK")
</pallas_src>

<mosaic_0001>
module attributes {stable_mosaic.version = 11 : i64} {
  func.func @_fused_tracking_kernel(%arg0: i32, %arg1: memref<1x8x1xi32, #tpu.memory_space<vmem>>, %arg2: memref<1x1x128xi32, #tpu.memory_space<vmem>>, %arg3: memref<1x8x4xf32, #tpu.memory_space<vmem>>, %arg4: memref<1x4x128xf32, #tpu.memory_space<vmem>>, %arg5: memref<1x8x128xf32, #tpu.memory_space<vmem>>, %arg6: memref<1x8x128xf32, #tpu.memory_space<vmem>>, %arg7: memref<1x8x128xi32, #tpu.memory_space<vmem>>, %arg8: memref<1x8x128xf32, #tpu.memory_space<vmem>>, %arg9: memref<1x8x128xf32, #tpu.memory_space<vmem>>) attributes {dimension_semantics = [#tpu.dimension_semantics<parallel>], iteration_bounds = array<i64: 2>, scalar_prefetch = 0 : i64, scratch_operands = 0 : i64, tpu.core_type = #tpu.core_type<tc>, window_params = [{transform_indices = @transform_0, window_bounds = array<i64: 1, 8, 1>}, {transform_indices = @transform_1, window_bounds = array<i64: 1, 1, 128>}, {transform_indices = @transform_2, window_bounds = array<i64: 1, 8, 4>}, {transform_indices = @transform_3, window_bounds = array<i64: 1, 4, 128>}, {transform_indices = @transform_4, window_bounds = array<i64: 1, 8, 128>}, {transform_indices = @transform_5, window_bounds = array<i64: 1, 8, 128>}, {transform_indices = @transform_6, window_bounds = array<i64: 1, 8, 128>}, {transform_indices = @transform_7, window_bounds = array<i64: 1, 8, 128>}, {transform_indices = @transform_8, window_bounds = array<i64: 1, 8, 128>}]} {
    %c0 = arith.constant 0 : index
    %c0_0 = arith.constant 0 : index
    %c0_1 = arith.constant 0 : index
    %0 = vector.load %arg1[%c0, %c0_0, %c0_1] : memref<1x8x1xi32, #tpu.memory_space<vmem>>, vector<1x8x1xi32>
    %1 = vector.shape_cast %0 : vector<1x8x1xi32> to vector<8x1xi32>
    %c0_2 = arith.constant 0 : index
    %c0_3 = arith.constant 0 : index
    %c0_4 = arith.constant 0 : index
    %2 = vector.load %arg2[%c0_2, %c0_3, %c0_4] : memref<1x1x128xi32, #tpu.memory_space<vmem>>, vector<1x1x128xi32>
    %3 = vector.shape_cast %2 : vector<1x1x128xi32> to vector<1x128xi32>
    %4 = vector.broadcast %1 : vector<8x1xi32> to vector<8x128xi32>
    %5 = vector.broadcast %3 : vector<1x128xi32> to vector<8x128xi32>
    %6 = arith.cmpi eq, %4, %5 : vector<8x128xi32>
    %7 = arith.extui %6 : vector<8x128xi1> to vector<8x128xi32>
    %cst = arith.constant dense<-2147483648> : vector<8xi32>
    %8 = vector.multi_reduction <maxsi>, %7, %cst [1] : vector<8x128xi32> to vector<8xi32>
    %9 = vector.shape_cast %8 : vector<8xi32> to vector<8x1xi32>
    %10 = tpu.iota {dimensions = array<i32: 1>} : vector<8x128xi32>
    %c-1_i32 = arith.constant -1 : i32
    %11 = vector.broadcast %c-1_i32 : i32 to vector<8x128xi32>
    %12 = arith.select %6, %10, %11 : vector<8x128xi1>, vector<8x128xi32>
    %cst_5 = arith.constant dense<-2147483648> : vector<8xi32>
    %13 = vector.multi_reduction <maxsi>, %12, %cst_5 [1] : vector<8x128xi32> to vector<8xi32>
    %14 = vector.shape_cast %13 : vector<8xi32> to vector<8x1xi32>
    %15 = tpu.iota {dimensions = array<i32: 1>} : vector<8x128xi32>
    %c0_i32 = arith.constant 0 : i32
    %16 = vector.broadcast %c0_i32 : i32 to vector<8x128xi32>
    %17 = arith.cmpi eq, %15, %16 : vector<8x128xi32>
    %c1_i32 = arith.constant 1 : i32
    %18 = vector.broadcast %c1_i32 : i32 to vector<8x128xi32>
    %19 = arith.cmpi eq, %15, %18 : vector<8x128xi32>
    %c0_i32_6 = arith.constant 0 : i32
    %20 = vector.shape_cast %14 : vector<8x1xi32> to vector<8x1xi32>
    %21 = vector.broadcast %20 : vector<8x1xi32> to vector<8x128xi32>
    %22 = vector.broadcast %c0_i32_6 : i32 to vector<8x128xi32>
    %23 = arith.select %19, %21, %22 : vector<8x128xi1>, vector<8x128xi32>
    %24 = vector.shape_cast %9 : vector<8x1xi32> to vector<8x1xi32>
    %25 = vector.broadcast %24 : vector<8x1xi32> to vector<8x128xi32>
    %26 = arith.select %17, %25, %23 : vector<8x128xi1>, vector<8x128xi32>
    %c0_7 = arith.constant 0 : index
    %c0_8 = arith.constant 0 : index
    %c0_9 = arith.constant 0 : index
    %27 = vector.load %arg7[%c0_7, %c0_8, %c0_9] : memref<1x8x128xi32, #tpu.memory_space<vmem>>, vector<1x8x128xi32>
    %28 = vector.shape_cast %27 : vector<1x8x128xi32> to vector<8x128xi32>
    %29 = vector.shape_cast %26 : vector<8x128xi32> to vector<1x8x128xi32>
    tpu.vector_store %arg7[%c0_7, %c0_8, %c0_9], %29 {strides = array<i32>} : memref<1x8x128xi32, #tpu.memory_space<vmem>>, vector<1x8x128xi32>,
    %c0_10 = arith.constant 0 : index
    %c0_11 = arith.constant 0 : index
    %c0_12 = arith.constant 0 : index
    %30 = vector.load %arg3[%c0_10, %c0_11, %c0_12] : memref<1x8x4xf32, #tpu.memory_space<vmem>>, vector<1x8x4xf32>
    %31 = vector.shape_cast %30 : vector<1x8x4xf32> to vector<8x4xf32>
    %c0_13 = arith.constant 0 : index
    %c0_14 = arith.constant 0 : index
    %c0_15 = arith.constant 0 : index
    %32 = vector.load %arg4[%c0_13, %c0_14, %c0_15] : memref<1x4x128xf32, #tpu.memory_space<vmem>>, vector<1x4x128xf32>
    %33 = vector.shape_cast %32 : vector<1x4x128xf32> to vector<4x128xf32>
    %34 = vector.extract_strided_slice %31 {offsets = [0, 0], sizes = [8, 1], strides = [1, 1]} : vector<8x4xf32> to vector<8x1xf32>
    %35 = vector.extract_strided_slice %31 {offsets = [0, 2], sizes = [8, 1], strides = [1, 1]} : vector<8x4xf32> to vector<8x1xf32>
    %cst_16 = arith.constant 5.000000e-01 : f32
    %36 = vector.broadcast %cst_16 : f32 to vector<8x1xf32>
    %37 = arith.mulf %36, %35 : vector<8x1xf32>
    %38 = arith.subf %34, %37 : vector<8x1xf32>
    %39 = vector.extract_strided_slice %31 {offsets = [0, 1], sizes = [8, 1], strides = [1, 1]} : vector<8x4xf32> to vector<8x1xf32>
    %40 = vector.extract_strided_slice %31 {offsets = [0, 3], sizes = [8, 1], strides = [1, 1]} : vector<8x4xf32> to vector<8x1xf32>
    %cst_17 = arith.constant 5.000000e-01 : f32
    %41 = vector.broadcast %cst_17 : f32 to vector<8x1xf32>
    %42 = arith.mulf %41, %40 : vector<8x1xf32>
    %43 = arith.subf %39, %42 : vector<8x1xf32>
    %44 = vector.extract_strided_slice %31 {offsets = [0, 0], sizes = [8, 1], strides = [1, 1]} : vector<8x4xf32> to vector<8x1xf32>
    %45 = vector.extract_strided_slice %31 {offsets = [0, 2], sizes = [8, 1], strides = [1, 1]} : vector<8x4xf32> to vector<8x1xf32>
    %cst_18 = arith.constant 5.000000e-01 : f32
    %46 = vector.broadcast %cst_18 : f32 to vector<8x1xf32>
    %47 = arith.mulf %46, %45 : vector<8x1xf32>
    %48 = arith.addf %44, %47 : vector<8x1xf32>
    %49 = vector.extract_strided_slice %31 {offsets = [0, 1], sizes = [8, 1], strides = [1, 1]} : vector<8x4xf32> to vector<8x1xf32>
    %50 = vector.extract_strided_slice %31 {offsets = [0, 3], sizes = [8, 1], strides = [1, 1]} : vector<8x4xf32> to vector<8x1xf32>
    %cst_19 = arith.constant 5.000000e-01 : f32
    %51 = vector.broadcast %cst_19 : f32 to vector<8x1xf32>
    %52 = arith.mulf %51, %50 : vector<8x1xf32>
    %53 = arith.addf %49, %52 : vector<8x1xf32>
    %54 = vector.extract_strided_slice %33 {offsets = [0, 0], sizes = [1, 128], strides = [1, 1]} : vector<4x128xf32> to vector<1x128xf32>
    %55 = vector.extract_strided_slice %33 {offsets = [2, 0], sizes = [1, 128], strides = [1, 1]} : vector<4x128xf32> to vector<1x128xf32>
    %cst_20 = arith.constant 5.000000e-01 : f32
    %56 = vector.broadcast %cst_20 : f32 to vector<1x128xf32>
    %57 = arith.mulf %56, %55 : vector<1x128xf32>
    %58 = arith.subf %54, %57 : vector<1x128xf32>
    %59 = vector.extract_strided_slice %33 {offsets = [1, 0], sizes = [1, 128], strides = [1, 1]} : vector<4x128xf32> to vector<1x128xf32>
    %60 = vector.extract_strided_slice %33 {offsets = [3, 0], sizes = [1, 128], strides = [1, 1]} : vector<4x128xf32> to vector<1x128xf32>
    %cst_21 = arith.constant 5.000000e-01 : f32
    %61 = vector.broadcast %cst_21 : f32 to vector<1x128xf32>
    %62 = arith.mulf %61, %60 : vector<1x128xf32>
    %63 = arith.subf %59, %62 : vector<1x128xf32>
    %64 = vector.extract_strided_slice %33 {offsets = [0, 0], sizes = [1, 128], strides = [1, 1]} : vector<4x128xf32> to vector<1x128xf32>
    %65 = vector.extract_strided_slice %33 {offsets = [2, 0], sizes = [1, 128], strides = [1, 1]} : vector<4x128xf32> to vector<1x128xf32>
    %cst_22 = arith.constant 5.000000e-01 : f32
    %66 = vector.broadcast %cst_22 : f32 to vector<1x128xf32>
    %67 = arith.mulf %66, %65 : vector<1x128xf32>
    %68 = arith.addf %64, %67 : vector<1x128xf32>
    %69 = vector.extract_strided_slice %33 {offsets = [1, 0], sizes = [1, 128], strides = [1, 1]} : vector<4x128xf32> to vector<1x128xf32>
    %70 = vector.extract_strided_slice %33 {offsets = [3, 0], sizes = [1, 128], strides = [1, 1]} : vector<4x128xf32> to vector<1x128xf32>
    %cst_23 = arith.constant 5.000000e-01 : f32
    %71 = vector.broadcast %cst_23 : f32 to vector<1x128xf32>
    %72 = arith.mulf %71, %70 : vector<1x128xf32>
    %73 = arith.addf %69, %72 : vector<1x128xf32>
    %74 = arith.subf %48, %38 : vector<8x1xf32>
    %75 = arith.subf %53, %43 : vector<8x1xf32>
    %76 = arith.mulf %74, %75 : vector<8x1xf32>
    %77 = arith.subf %68, %58 : vector<1x128xf32>
    %78 = arith.subf %73, %63 : vector<1x128xf32>
    %79 = arith.mulf %77, %78 : vector<1x128xf32>
    %80 = vector.broadcast %48 : vector<8x1xf32> to vector<8x128xf32>
    %81 = vector.broadcast %68 : vector<1x128xf32> to vector<8x128xf32>
    %82 = arith.minimumf %80, %81 : vector<8x128xf32>
    %83 = vector.broadcast %38 : vector<8x1xf32> to vector<8x128xf32>
    %84 = vector.broadcast %58 : vector<1x128xf32> to vector<8x128xf32>
    %85 = arith.maximumf %83, %84 : vector<8x128xf32>
    %86 = arith.subf %82, %85 : vector<8x128xf32>
    %cst_24 = arith.constant 0.000000e+00 : f32
    %87 = vector.broadcast %cst_24 : f32 to vector<8x128xf32>
    %88 = arith.maximumf %86, %87 : vector<8x128xf32>
    %89 = vector.broadcast %53 : vector<8x1xf32> to vector<8x128xf32>
    %90 = vector.broadcast %73 : vector<1x128xf32> to vector<8x128xf32>
    %91 = arith.minimumf %89, %90 : vector<8x128xf32>
    %92 = vector.broadcast %43 : vector<8x1xf32> to vector<8x128xf32>
    %93 = vector.broadcast %63 : vector<1x128xf32> to vector<8x128xf32>
    %94 = arith.maximumf %92, %93 : vector<8x128xf32>
    %95 = arith.subf %91, %94 : vector<8x128xf32>
    %cst_25 = arith.constant 0.000000e+00 : f32
    %96 = vector.broadcast %cst_25 : f32 to vector<8x128xf32>
    %97 = arith.maximumf %95, %96 : vector<8x128xf32>
    %98 = arith.mulf %88, %97 : vector<8x128xf32>
    %99 = vector.broadcast %76 : vector<8x1xf32> to vector<8x128xf32>
    %100 = vector.broadcast %79 : vector<1x128xf32> to vector<8x128xf32>
    %101 = arith.addf %99, %100 : vector<8x128xf32>
    %102 = arith.subf %101, %98 : vector<8x128xf32>
    %cst_26 = arith.constant 1.000000e-07 : f32
    %103 = vector.broadcast %cst_26 : f32 to vector<8x128xf32>
    %104 = arith.maximumf %102, %103 : vector<8x128xf32>
    %105 = tpu.reciprocal %104 {approx = true} : vector<8x128xf32> -> vector<8x128xf32>
    %106 = arith.mulf %98, %105 : vector<8x128xf32>
    %c0_27 = arith.constant 0 : index
    %c0_28 = arith.constant 0 : index
    %c0_29 = arith.constant 0 : index
    %107 = vector.load %arg8[%c0_27, %c0_28, %c0_29] : memref<1x8x128xf32, #tpu.memory_space<vmem>>, vector<1x8x128xf32>
    %108 = vector.shape_cast %107 : vector<1x8x128xf32> to vector<8x128xf32>
    %109 = vector.shape_cast %106 : vector<8x128xf32> to vector<1x8x128xf32>
    tpu.vector_store %arg8[%c0_27, %c0_28, %c0_29], %109 {strides = array<i32>} : memref<1x8x128xf32, #tpu.memory_space<vmem>>, vector<1x8x128xf32>,
    %c0_30 = arith.constant 0 : index
    %c0_31 = arith.constant 0 : index
    %c0_32 = arith.constant 0 : index
    %110 = vector.load %arg5[%c0_30, %c0_31, %c0_32] : memref<1x8x128xf32, #tpu.memory_space<vmem>>, vector<1x8x128xf32>
    %111 = vector.shape_cast %110 : vector<1x8x128xf32> to vector<8x128xf32>
    %112 = tpu.iota {dimensions = array<i32: 1>} : vector<8x128xi32>
    %c32_i32 = arith.constant 32 : i32
    %113 = vector.broadcast %c32_i32 : i32 to vector<8x128xi32>
    %114 = arith.cmpi slt, %112, %113 : vector<8x128xi32>
    %cst_33 = arith.constant 0.000000e+00 : f32
    %115 = vector.broadcast %cst_33 : f32 to vector<8x128xf32>
    %116 = arith.select %114, %111, %115 : vector<8x128xi1>, vector<8x128xf32>
    %cst_34 = arith.constant dense<0.000000e+00> : vector<8xf32>
    %117 = vector.multi_reduction <add>, %116, %cst_34 [1] : vector<8x128xf32> to vector<8xf32>
    %118 = vector.shape_cast %117 : vector<8xf32> to vector<8x1xf32>
    %cst_35 = arith.constant 3.200000e+01 : f32
    %119 = vector.broadcast %cst_35 : f32 to vector<8x1xf32>
    %120 = arith.divf %118, %119 : vector<8x1xf32>
    %121 = vector.broadcast %120 : vector<8x1xf32> to vector<8x128xf32>
    %122 = arith.subf %111, %121 : vector<8x128xf32>
    %cst_36 = arith.constant 0.000000e+00 : f32
    %123 = vector.broadcast %cst_36 : f32 to vector<8x128xf32>
    %124 = arith.select %114, %122, %123 : vector<8x128xi1>, vector<8x128xf32>
    %125 = arith.mulf %124, %124 : vector<8x128xf32>
    %cst_37 = arith.constant dense<0.000000e+00> : vector<8xf32>
    %126 = vector.multi_reduction <add>, %125, %cst_37 [1] : vector<8x128xf32> to vector<8xf32>
    %127 = vector.shape_cast %126 : vector<8xf32> to vector<8x1xf32>
    %cst_38 = arith.constant 3.100000e+01 : f32
    %128 = vector.broadcast %cst_38 : f32 to vector<8x1xf32>
    %129 = arith.divf %127, %128 : vector<8x1xf32>
    %130 = math.sqrt %129 : vector<8x1xf32>
    %c0_39 = arith.constant 0 : index
    %c0_40 = arith.constant 0 : index
    %c0_41 = arith.constant 0 : index
    %131 = vector.load %arg6[%c0_39, %c0_40, %c0_41] : memref<1x8x128xf32, #tpu.memory_space<vmem>>, vector<1x8x128xf32>
    %132 = vector.shape_cast %131 : vector<1x8x128xf32> to vector<8x128xf32>
    %133 = vector.broadcast %130 : vector<8x1xf32> to vector<8x128xf32>
    %134 = arith.mulf %132, %133 : vector<8x128xf32>
    %cst_42 = arith.constant 1.000000e-01 : f32
    %135 = vector.broadcast %cst_42 : f32 to vector<8x128xf32>
    %136 = arith.mulf %134, %135 : vector<8x128xf32>
    %137 = arith.addf %111, %136 : vector<8x128xf32>
    %c0_43 = arith.constant 0 : index
    %c0_44 = arith.constant 0 : index
    %c0_45 = arith.constant 0 : index
    %138 = vector.load %arg9[%c0_43, %c0_44, %c0_45] : memref<1x8x128xf32, #tpu.memory_space<vmem>>, vector<1x8x128xf32>
    %139 = vector.shape_cast %138 : vector<1x8x128xf32> to vector<8x128xf32>
    %140 = vector.shape_cast %137 : vector<8x128xf32> to vector<1x8x128xf32>
    tpu.vector_store %arg9[%c0_43, %c0_44, %c0_45], %140 {strides = array<i32>} : memref<1x8x128xf32, #tpu.memory_space<vmem>>, vector<1x8x128xf32>,
    return
  }
  func.func @transform_0(%arg0: i32) -> (i32, i32, i32) {
    %c0_i32 = arith.constant 0 : i32
    %c0_i32_0 = arith.constant 0 : i32
    %c0_i32_1 = arith.constant 0 : i32
    return %arg0, %c0_i32, %c0_i32_0 : i32, i32, i32
  }
  func.func @transform_1(%arg0: i32) -> (i32, i32, i32) {
    %c0_i32 = arith.constant 0 : i32
    %c0_i32_0 = arith.constant 0 : i32
    %c0_i32_1 = arith.constant 0 : i32
    return %arg0, %c0_i32, %c0_i32_0 : i32, i32, i32
  }
  func.func @transform_2(%arg0: i32) -> (i32, i32, i32) {
    %c0_i32 = arith.constant 0 : i32
    %c0_i32_0 = arith.constant 0 : i32
    %c0_i32_1 = arith.constant 0 : i32
    return %arg0, %c0_i32, %c0_i32_0 : i32, i32, i32
  }
  func.func @transform_3(%arg0: i32) -> (i32, i32, i32) {
    %c0_i32 = arith.constant 0 : i32
    %c0_i32_0 = arith.constant 0 : i32
    %c0_i32_1 = arith.constant 0 : i32
    return %arg0, %c0_i32, %c0_i32_0 : i32, i32, i32
  }
  func.func @transform_4(%arg0: i32) -> (i32, i32, i32) {
    %c0_i32 = arith.constant 0 : i32
    %c0_i32_0 = arith.constant 0 : i32
    %c0_i32_1 = arith.constant 0 : i32
    return %arg0, %c0_i32, %c0_i32_0 : i32, i32, i32
  }
  func.func @transform_5(%arg0: i32) -> (i32, i32, i32) {
    %c0_i32 = arith.constant 0 : i32
    %c0_i32_0 = arith.constant 0 : i32
    %c0_i32_1 = arith.constant 0 : i32
    return %arg0, %c0_i32, %c0_i32_0 : i32, i32, i32
  }
  func.func @transform_6(%arg0: i32) -> (i32, i32, i32) {
    %c0_i32 = arith.constant 0 : i32
    %c0_i32_0 = arith.constant 0 : i32
    %c0_i32_1 = arith.constant 0 : i32
    return %arg0, %c0_i32, %c0_i32_0 : i32, i32, i32
  }
  func.func @transform_7(%arg0: i32) -> (i32, i32, i32) {
    %c0_i32 = arith.constant 0 : i32
    %c0_i32_0 = arith.constant 0 : i32
    %c0_i32_1 = arith.constant 0 : i32
    return %arg0, %c0_i32, %c0_i32_0 : i32, i32, i32
  }
  func.func @transform_8(%arg0: i32) -> (i32, i32, i32) {
    %c0_i32 = arith.constant 0 : i32
    %c0_i32_0 = arith.constant 0 : i32
    %c0_i32_1 = arith.constant 0 : i32
    return %arg0, %c0_i32, %c0_i32_0 : i32, i32, i32
  }
}

</mosaic_0001>

<llo_original>
// kernel: fn.1
$region0: #{fn.1}
  #allocation0 [shape = 'u32[]', space=smem, size = 0x4, offset = 0x4, fixed_abs, tag = 'smem constant byte address 0x4 - core index']
  #allocation1 [shape = 'u32[144,128]{1,0:T(1,128)}', space=vmem, size = 0x12000, scoped, tag = 'internal scratch']
  %s0 = inlined_call_operand.vmem [shape: s32[2,8,1], index: 0, kind: input, shape index: {}]
  %s1 = inlined_call_operand.vmem [shape: s32[2,1,128], index: 1, kind: input, shape index: {}]
  %s2 = inlined_call_operand.vmem [shape: f32[2,8,4], index: 2, kind: input, shape index: {}]
  %s3 = inlined_call_operand.vmem [shape: f32[2,4,128], index: 3, kind: input, shape index: {}]
  %s4 = inlined_call_operand.vmem [shape: f32[2,8,128], index: 4, kind: input, shape index: {}]
  %s5 = inlined_call_operand.vmem [shape: f32[2,8,128], index: 5, kind: input, shape index: {}]
  %s6 = inlined_call_operand.hbm [shape: s32[2,8,128], index: 6, kind: output, shape index: {0}]
  %s7 = inlined_call_operand.hbm [shape: f32[2,8,128], index: 7, kind: output, shape index: {1}]
  %s8 = inlined_call_operand.hbm [shape: f32[2,8,128], index: 8, kind: output, shape index: {2}]
  %9 = xla_tuple %s6, %s7, %s8
  %s10 = sld [smem:[#allocation0]]
  $region73: #{fn.1} parent=0
    _
  %s12 = ssub.s32 1, %s10
  %s13 = scalar_select 0, %s12, %s10
  $region1: #{fn.1} parent=0
    #allocation2 [shape = 'u8[8192]{0}', space=vmem, size = 0x2000, scoped, tag = 'output window, operand 0']
    #allocation3 [shape = 's32[2]{0}', space=sflag, size = 0x8, scoped, tag = 'scoped memory for fn.1']
    #allocation4 [shape = 'u8[8192]{0}', space=vmem, size = 0x2000, scoped, tag = 'output window, operand 1']
    #allocation5 [shape = 's32[2]{0}', space=sflag, size = 0x8, scoped, tag = 'scoped memory for fn.1']
    #allocation6 [shape = 'u8[8192]{0}', space=vmem, size = 0x2000, scoped, tag = 'output window, operand 2']
    %14 = vsyncpa [#allocation3], 0
    %s15 = scalar_lea.sflag [#allocation3], 1
    %16 = vsyncpa %s15, 0
    %17 = vsyncpa [#allocation5], 0
    %s18 = scalar_lea.sflag [#allocation5], 1
    %19 = vsyncpa %s18, 0
    loop: start=0, step=1, limit=4
    $region2: #{fn.1} parent=1 // loop_pre_header
      _
    $region3: #{fn.1} parent=1 // loop_header
      %s21 = sphi 0, %s25
      %p22 = scmp.ge.s32.totalorder %s21, 4
      %s31 = sphi 0, %s33
      %s34 = sphi 0, %s31
      %s35 = sphi 0, %s34
      %s51 = sphi 0, %s35
      %s57 = sphi 0, %s59
      %s60 = sphi 0, %s57
      %s61 = sphi 0, %s60
      %s77 = sphi 0, %s61
      %s83 = sphi 0, %s85
      %s86 = sphi 0, %s83
      %s87 = sphi 0, %s86
      %s103 = sphi 0, %s87
      %s109 = sphi 0, %s111
      %s112 = sphi 0, %s109
      %s113 = sphi 0, %s112
      %s129 = sphi 0, %s113
      %s135 = sphi 0, %s137
      %s138 = sphi 0, %s135
      %s139 = sphi 0, %s138
      %s155 = sphi 0, %s139
      %s161 = sphi 0, %s163
      %s164 = sphi 0, %s161
      %s165 = sphi 0, %s164
      %s181 = sphi 0, %s165
      %s187 = sphi 0, %s189
      %s190 = sphi 0, %s187
      %s191 = sphi 0, %s190
      %s207 = sphi 0, %s191
      %s213 = sphi 0, %s215
      %s216 = sphi 0, %s213
      %s217 = sphi 0, %s216
      %s233 = sphi 0, %s217
      %s239 = sphi 0, %s241
      %s242 = sphi 0, %s239
      %s243 = sphi 0, %s242
      %s259 = sphi 0, %s243
    $region4: #{fn.1} parent=1 // loop_header_branch
      %24 = sbr.rel (%p22) target = $region8
    $region5: #{fn.1} parent=1 // loop_body
      %s26 = ssub.s32 %s21, 1
      %s27 = ssub.s32 %s21, 2
      %s28 = sadd.s32 %s21, 1
      %s29 = ssub.s32 %s21, %s28
      %p30 = scmp.eq.s32.totalorder %s29, 0
      %s32 = sadd.s32 %s31, 1
      %s33 = scalar_select %p30, %s31, %s32
      %p36 = pneg %p30
      %p37 = scmp.eq.s32.totalorder %s21, 1
      %p38 = por %p36, %p37
      %p39 = scmp.ne.s32.totalorder %s31, %s34
      %p40 = scmp.eq.s32.totalorder %s21, 0
      %p41 = por %p39, %p40
      %p42 = scmp.ne.s32.totalorder %s31, %s34
      %p43 = scmp.eq.s32.totalorder %s26, 1
      %p44 = por %p42, %p43
      %p45 = scmp.ne.s32.totalorder %s34, %s35
      %p46 = scmp.eq.s32.totalorder %s26, 0
      %p47 = por %p45, %p46
      %p48 = scmp.ne.s32.totalorder %s34, %s35
      %p49 = scmp.eq.s32.totalorder %s27, 1
      %p50 = por %p48, %p49
      %p52 = scmp.ne.s32.totalorder %s35, %s51
      %p53 = scmp.eq.s32.totalorder %s27, 0
      %p54 = por %p52, %p53
      %s55 = ssub.s32 %s21, %s28
      %p56 = scmp.eq.s32.totalorder %s55, 0
      %s58 = sadd.s32 %s57, 1
      %s59 = scalar_select %p56, %s57, %s58
      %p62 = pneg %p56
      %p63 = scmp.eq.s32.totalorder %s21, 1
      %p64 = por %p62, %p63
      %p65 = scmp.ne.s32.totalorder %s57, %s60
      %p66 = scmp.eq.s32.totalorder %s21, 0
      %p67 = por %p65, %p66
      %p68 = scmp.ne.s32.totalorder %s57, %s60
      %p69 = scmp.eq.s32.totalorder %s26, 1
      %p70 = por %p68, %p69
      %p71 = scmp.ne.s32.totalorder %s60, %s61
      %p72 = scmp.eq.s32.totalorder %s26, 0
      %p73 = por %p71, %p72
      %p74 = scmp.ne.s32.totalorder %s60, %s61
      %p75 = scmp.eq.s32.totalorder %s27, 1
      %p76 = por %p74, %p75
      %p78 = scmp.ne.s32.totalorder %s61, %s77
      %p79 = scmp.eq.s32.totalorder %s27, 0
      %p80 = por %p78, %p79
      %s81 = ssub.s32 %s21, %s28
      %p82 = scmp.eq.s32.totalorder %s81, 0
      %s84 = sadd.s32 %s83, 1
      %s85 = scalar_select %p82, %s83, %s84
      %p88 = pneg %p82
      %p89 = scmp.eq.s32.totalorder %s21, 1
      %p90 = por %p88, %p89
      %p91 = scmp.ne.s32.totalorder %s83, %s86
      %p92 = scmp.eq.s32.totalorder %s21, 0
      %p93 = por %p91, %p92
      %p94 = scmp.ne.s32.totalorder %s83, %s86
      %p95 = scmp.eq.s32.totalorder %s26, 1
      %p96 = por %p94, %p95
      %p97 = scmp.ne.s32.totalorder %s86, %s87
      %p98 = scmp.eq.s32.totalorder %s26, 0
      %p99 = por %p97, %p98
      %p100 = scmp.ne.s32.totalorder %s86, %s87
      %p101 = scmp.eq.s32.totalorder %s27, 1
      %p102 = por %p100, %p101
      %p104 = scmp.ne.s32.totalorder %s87, %s103
      %p105 = scmp.eq.s32.totalorder %s27, 0
      %p106 = por %p104, %p105
      %s107 = ssub.s32 %s21, %s28
      %p108 = scmp.eq.s32.totalorder %s107, 0
      %s110 = sadd.s32 %s109, 1
      %s111 = scalar_select %p108, %s109, %s110
      %p114 = pneg %p108
      %p115 = scmp.eq.s32.totalorder %s21, 1
      %p116 = por %p114, %p115
      %p117 = scmp.ne.s32.totalorder %s109, %s112
      %p118 = scmp.eq.s32.totalorder %s21, 0
      %p119 = por %p117, %p118
      %p120 = scmp.ne.s32.totalorder %s109, %s112
      %p121 = scmp.eq.s32.totalorder %s26, 1
      %p122 = por %p120, %p121
      %p123 = scmp.ne.s32.totalorder %s112, %s113
      %p124 = scmp.eq.s32.totalorder %s26, 0
      %p125 = por %p123, %p124
      %p126 = scmp.ne.s32.totalorder %s112, %s113
      %p127 = scmp.eq.s32.totalorder %s27, 1
      %p128 = por %p126, %p127
      %p130 = scmp.ne.s32.totalorder %s113, %s129
      %p131 = scmp.eq.s32.totalorder %s27, 0
      %p132 = por %p130, %p131
      %s133 = ssub.s32 %s21, %s28
      %p134 = scmp.eq.s32.totalorder %s133, 0
      %s136 = sadd.s32 %s135, 1
      %s137 = scalar_select %p134, %s135, %s136
      %p140 = pneg %p134
      %p141 = scmp.eq.s32.totalorder %s21, 1
      %p142 = por %p140, %p141
      %p143 = scmp.ne.s32.totalorder %s135, %s138
      %p144 = scmp.eq.s32.totalorder %s21, 0
      %p145 = por %p143, %p144
      %p146 = scmp.ne.s32.totalorder %s135, %s138
      %p147 = scmp.eq.s32.totalorder %s26, 1
      %p148 = por %p146, %p147
      %p149 = scmp.ne.s32.totalorder %s138, %s139
      %p150 = scmp.eq.s32.totalorder %s26, 0
      %p151 = por %p149, %p150
      %p152 = scmp.ne.s32.totalorder %s138, %s139
      %p153 = scmp.eq.s32.totalorder %s27, 1
      %p154 = por %p152, %p153
      %p156 = scmp.ne.s32.totalorder %s139, %s155
      %p157 = scmp.eq.s32.totalorder %s27, 0
      %p158 = por %p156, %p157
      %s159 = ssub.s32 %s21, %s28
      %p160 = scmp.eq.s32.totalorder %s159, 0
      %s162 = sadd.s32 %s161, 1
      %s163 = scalar_select %p160, %s161, %s162
      %p166 = pneg %p160
      %p167 = scmp.eq.s32.totalorder %s21, 1
      %p168 = por %p166, %p167
      %p169 = scmp.ne.s32.totalorder %s161, %s164
      %p170 = scmp.eq.s32.totalorder %s21, 0
      %p171 = por %p169, %p170
      %p172 = scmp.ne.s32.totalorder %s161, %s164
      %p173 = scmp.eq.s32.totalorder %s26, 1
      %p174 = por %p172, %p173
      %p175 = scmp.ne.s32.totalorder %s164, %s165
      %p176 = scmp.eq.s32.totalorder %s26, 0
      %p177 = por %p175, %p176
      %p178 = scmp.ne.s32.totalorder %s164, %s165
      %p179 = scmp.eq.s32.totalorder %s27, 1
      %p180 = por %p178, %p179
      %p182 = scmp.ne.s32.totalorder %s165, %s181
      %p183 = scmp.eq.s32.totalorder %s27, 0
      %p184 = por %p182, %p183
      %s185 = ssub.s32 %s21, %s28
      %p186 = scmp.eq.s32.totalorder %s185, 0
      %s188 = sadd.s32 %s187, 1
      %s189 = scalar_select %p186, %s187, %s188
      %p192 = pneg %p186
      %p193 = scmp.eq.s32.totalorder %s21, 1
      %p194 = por %p192, %p193
      %p195 = scmp.ne.s32.totalorder %s187, %s190
      %p196 = scmp.eq.s32.totalorder %s21, 0
      %p197 = por %p195, %p196
      %p198 = scmp.ne.s32.totalorder %s187, %s190
      %p199 = scmp.eq.s32.totalorder %s26, 1
      %p200 = por %p198, %p199
      %p201 = scmp.ne.s32.totalorder %s190, %s191
      %p202 = scmp.eq.s32.totalorder %s26, 0
      %p203 = por %p201, %p202
      %p204 = scmp.ne.s32.totalorder %s190, %s191
      %p205 = scmp.eq.s32.totalorder %s27, 1
      %p206 = por %p204, %p205
      %p208 = scmp.ne.s32.totalorder %s191, %s207
      %p209 = scmp.eq.s32.totalorder %s27, 0
      %p210 = por %p208, %p209
      %s211 = ssub.s32 %s21, %s28
      %p212 = scmp.eq.s32.totalorder %s211, 0
      %s214 = sadd.s32 %s213, 1
      %s215 = scalar_select %p212, %s213, %s214
      %p218 = pneg %p212
      %p219 = scmp.eq.s32.totalorder %s21, 1
      %p220 = por %p218, %p219
      %p221 = scmp.ne.s32.totalorder %s213, %s216
      %p222 = scmp.eq.s32.totalorder %s21, 0
      %p223 = por %p221, %p222
      %p224 = scmp.ne.s32.totalorder %s213, %s216
      %p225 = scmp.eq.s32.totalorder %s26, 1
      %p226 = por %p224, %p225
      %p227 = scmp.ne.s32.totalorder %s216, %s217
      %p228 = scmp.eq.s32.totalorder %s26, 0
      %p229 = por %p227, %p228
      %p230 = scmp.ne.s32.totalorder %s216, %s217
      %p231 = scmp.eq.s32.totalorder %s27, 1
      %p232 = por %p230, %p231
      %p234 = scmp.ne.s32.totalorder %s217, %s233
      %p235 = scmp.eq.s32.totalorder %s27, 0
      %p236 = por %p234, %p235
      %s237 = ssub.s32 %s21, %s28
      %p238 = scmp.eq.s32.totalorder %s237, 0
      %s240 = sadd.s32 %s239, 1
      %s241 = scalar_select %p238, %s239, %s240
      %p244 = pneg %p238
      %p245 = scmp.eq.s32.totalorder %s21, 1
      %p246 = por %p244, %p245
      %p247 = scmp.ne.s32.totalorder %s239, %s242
      %p248 = scmp.eq.s32.totalorder %s21, 0
      %p249 = por %p247, %p248
      %p250 = scmp.ne.s32.totalorder %s239, %s242
      %p251 = scmp.eq.s32.totalorder %s26, 1
      %p252 = por %p250, %p251
      %p253 = scmp.ne.s32.totalorder %s242, %s243
      %p254 = scmp.eq.s32.totalorder %s26, 0
      %p255 = por %p253, %p254
      %p256 = scmp.ne.s32.totalorder %s242, %s243
      %p257 = scmp.eq.s32.totalorder %s27, 1
      %p258 = por %p256, %p257
      %p260 = scmp.ne.s32.totalorder %s243, %s259
      %p261 = scmp.eq.s32.totalorder %s27, 0
      %p262 = por %p260, %p261
      %p263 = scmp.le.s32.totalorder 1, %s21
      %p264 = scmp.lt.s32.totalorder %s21, 3
      %p265 = pnand %p263, %p264
      %p266 = pneg %p265
      // Predicated region
      $region9: #{fn.1} parent=5 // pred_check
        _
      $region10: #{fn.1} parent=5 // pred_check_branch
        %268 = sbr.rel (%p265) target = $region12
      $region11: #{fn.1} parent=5 // pred_region
        %s269 = ssub.s32 %s21, 1
      $region12: #{fn.1} parent=5 // pred_fallthru
        _
      %p270 = scmp.lt.s32.totalorder %s21, 2
      // Predicated region
      $region13: #{fn.1} parent=5 // pred_check
        %p271 = pneg %p270
      $region14: #{fn.1} parent=5 // pred_check_branch
        %273 = sbr.rel (%p271) target = $region16
      $region15: #{fn.1} parent=5 // pred_region
        // Predicated region
        $region17: #{fn.1} parent=15 // pred_check
          %p274 = pneg %p41
        $region18: #{fn.1} parent=15 // pred_check_branch
          %276 = sbr.rel (%p274) target = $region20
        $region19: #{fn.1} parent=15 // pred_region
          %p277 = scmp.lt.s32.totalorder %s21, 1
          %s278 = scalar_select %p277, %s21, 1
          %s279 = smul.addr %s278, 8
          %s280 = scalar_lea.vmem %s0, %s279
        $region20: #{fn.1} parent=15 // pred_fallthru
          _
        // Predicated region
        $region21: #{fn.1} parent=15 // pred_check
          %p281 = pneg %p67
        $region22: #{fn.1} parent=15 // pred_check_branch
          %283 = sbr.rel (%p281) target = $region24
        $region23: #{fn.1} parent=15 // pred_region
          %p284 = scmp.lt.s32.totalorder %s21, 1
          %s285 = scalar_select %p284, %s21, 1
          %s286 = scalar_lea.vmem %s1, %s285
        $region24: #{fn.1} parent=15 // pred_fallthru
          _
        // Predicated region
        $region25: #{fn.1} parent=15 // pred_check
          %p287 = pneg %p93
        $region26: #{fn.1} parent=15 // pred_check_branch
          %289 = sbr.rel (%p287) target = $region28
        $region27: #{fn.1} parent=15 // pred_region
          %p290 = scmp.lt.s32.totalorder %s21, 1
          %s291 = scalar_select %p290, %s21, 1
          %s292 = smul.addr %s291, 8
          %s293 = scalar_lea.vmem %s2, %s292
        $region28: #{fn.1} parent=15 // pred_fallthru
          _
        // Predicated region
        $region29: #{fn.1} parent=15 // pred_check
          %p294 = pneg %p119
        $region30: #{fn.1} parent=15 // pred_check_branch
          %296 = sbr.rel (%p294) target = $region32
        $region31: #{fn.1} parent=15 // pred_region
          %p297 = scmp.lt.s32.totalorder %s21, 1
          %s298 = scalar_select %p297, %s21, 1
          %s299 = smul.addr %s298, 4
          %s300 = scalar_lea.vmem %s3, %s299
        $region32: #{fn.1} parent=15 // pred_fallthru
          _
        // Predicated region
        $region33: #{fn.1} parent=15 // pred_check
          %p301 = pneg %p145
        $region34: #{fn.1} parent=15 // pred_check_branch
          %303 = sbr.rel (%p301) target = $region36
        $region35: #{fn.1} parent=15 // pred_region
          %p304 = scmp.lt.s32.totalorder %s21, 1
          %s305 = scalar_select %p304, %s21, 1
          %s306 = smul.addr %s305, 8
          %s307 = scalar_lea.vmem %s4, %s306
        $region36: #{fn.1} parent=15 // pred_fallthru
          _
        // Predicated region
        $region37: #{fn.1} parent=15 // pred_check
          %p308 = pneg %p171
        $region38: #{fn.1} parent=15 // pred_check_branch
          %310 = sbr.rel (%p308) target = $region40
        $region39: #{fn.1} parent=15 // pred_region
          %p311 = scmp.lt.s32.totalorder %s21, 1
          %s312 = scalar_select %p311, %s21, 1
          %s313 = smul.addr %s312, 8
          %s314 = scalar_lea.vmem %s5, %s313
        $region40: #{fn.1} parent=15 // pred_fallthru
          _
      $region16: #{fn.1} parent=5 // pred_fallthru
        _
      %p315 = scmp.le.s32.totalorder 1, %s21
      %p316 = scmp.lt.s32.totalorder %s21, 3
      %p317 = pnand %p315, %p316
      %p318 = pneg %p317
      // Predicated region
      $region41: #{fn.1} parent=5 // pred_check
        _
      $region42: #{fn.1} parent=5 // pred_check_branch
        %320 = sbr.rel (%p317) target = $region44
      $region43: #{fn.1} parent=5 // pred_region
        %s321 = ssub.s32 %s21, 1
        %p322 = scmp.lt.s32.totalorder %s26, 1
        %s323 = scalar_select %p322, %s26, 1
        %s324 = smul.addr %s323, 8
        %s325 = scalar_lea.vmem %s0, %s324
        %p326 = pneg %p47
        %p327 = pneg %p44
        %p328 = scmp.lt.s32.totalorder %s26, 1
        %s329 = scalar_select %p328, %s26, 1
        %s330 = scalar_lea.vmem %s1, %s329
        %p331 = pneg %p73
        %p332 = pneg %p70
        %p333 = scmp.lt.s32.totalorder %s26, 1
        %s334 = scalar_select %p333, %s26, 1
        %s335 = smul.addr %s334, 8
        %s336 = scalar_lea.vmem %s2, %s335
        %p337 = pneg %p99
        %p338 = pneg %p96
        %p339 = scmp.lt.s32.totalorder %s26, 1
        %s340 = scalar_select %p339, %s26, 1
        %s341 = smul.addr %s340, 4
        %s342 = scalar_lea.vmem %s3, %s341
        %p343 = pneg %p125
        %p344 = pneg %p122
        %p345 = scmp.lt.s32.totalorder %s26, 1
        %s346 = scalar_select %p345, %s26, 1
        %s347 = smul.addr %s346, 8
        %s348 = scalar_lea.vmem %s4, %s347
        %p349 = pneg %p151
        %p350 = pneg %p148
        %p351 = scmp.lt.s32.totalorder %s26, 1
        %s352 = scalar_select %p351, %s26, 1
        %s353 = smul.addr %s352, 8
        %s354 = scalar_lea.vmem %s5, %s353
        %p355 = pneg %p177
        %p356 = pneg %p174
        %p357 = pneg %p203
        %p358 = pneg %p200
        %s359 = sand.u32 %s190, 1
        %s360 = scalar_lea.sflag [#allocation3], %s359
        %s361 = sand.u32 %s190, 1
        %s362 = smul.addr %s361, 8
        %s363 = scalar_lea.vmem [#allocation2], %s362
        %p364 = pneg %p229
        %p365 = pneg %p226
        %s366 = sand.u32 %s26, 1
        %s367 = scalar_lea.sflag [#allocation5], %s366
        %s368 = sand.u32 %s216, 1
        %s369 = smul.addr %s368, 8
        %s370 = scalar_lea.vmem [#allocation4], %s369
        %p371 = pneg %p255
        %p372 = pneg %p252
        %s373 = sand.u32 %s26, 1
        %s374 = scalar_lea.sflag [#allocation5], %s373
        %s375 = sand.u32 %s242, 1
        %s376 = smul.addr %s375, 8
        %s377 = scalar_lea.vmem [#allocation6], %s376
        %p378 = scmp.lt.s32.totalorder %s26, 1
        %s379 = scalar_select %p378, %s26, 1
        %s380 = smul.addr %s379, 8
        %s381 = scalar_lea.vmem %s0, %s380
        %p382 = scmp.lt.s32.totalorder %s26, 1
        %s383 = scalar_select %p382, %s26, 1
        %s384 = scalar_lea.vmem %s1, %s383
        %p385 = scmp.lt.s32.totalorder %s26, 1
        %s386 = scalar_select %p385, %s26, 1
        %s387 = smul.addr %s386, 8
        %s388 = scalar_lea.vmem %s2, %s387
        %p389 = scmp.lt.s32.totalorder %s26, 1
        %s390 = scalar_select %p389, %s26, 1
        %s391 = smul.addr %s390, 4
        %s392 = scalar_lea.vmem %s3, %s391
        %p393 = scmp.lt.s32.totalorder %s26, 1
        %s394 = scalar_select %p393, %s26, 1
        %s395 = smul.addr %s394, 8
        %s396 = scalar_lea.vmem %s4, %s395
        %p397 = scmp.lt.s32.totalorder %s26, 1
        %s398 = scalar_select %p397, %s26, 1
        %s399 = smul.addr %s398, 8
        %s400 = scalar_lea.vmem %s5, %s399
        %v401 = vld [vmem:[%s381] sm:$0xff]
        %v402 = vld [vmem:[%s384] sm:$0x1]
        %403 = vset.pattern.permute.xlu0 0
        %404 = vperm.xlu0 %403, %v401
        %v405 = vpop.permute.xlu0 %404
        %v406 = vlaneseq
        %v407 = vshrl.u32 %v406, 7
        %v408 = vsub.s32 0, %v407
        %v409 = vrot.slane %v402, %v408
        %vm410 = vcmp.eq.s32.totalorder %v405, %v409
        %v411 = vsel %vm410, 1, 0
        %v412 = vand.u32 %v411, 65535
        %v413 = vshra.s32 %v411, 16
        %v414 = vcvt.s32.f32 %v412
        %v415 = vcvt.s32.f32 %v413
        %416 = vmax.xlane.f32.xlu0 %v415
        %v417 = vpop.xlane.xlu0 %416
        %vm418 = vcmp.eq.f32.partialorder %v415, %v417
        %v419 = vsel %vm418, %v414, -inf
        %420 = vmax.xlane.f32.xlu0 %v419
        %v421 = vpop.xlane.xlu0 %420
        %v422 = vcvt.f32.s32 %v421
        %v423 = vcvt.f32.s32 %v417
        %v424 = vshll.u32 %v423, 16
        %v425 = vadd.s32 %v424, %v422
        %v426 = vlaneseq
        %v427 = vand.u32 %v426, 127
        %v428 = vsel %vm410, %v427, 4294967295
        %v429 = vand.u32 %v428, 65535
        %v430 = vshra.s32 %v428, 16
        %v431 = vcvt.s32.f32 %v429
        %v432 = vcvt.s32.f32 %v430
        %433 = vmax.xlane.f32.xlu0 %v432
        %v434 = vpop.xlane.xlu0 %433
        %vm435 = vcmp.eq.f32.partialorder %v432, %v434
        %v436 = vsel %vm435, %v431, -inf
        %437 = vmax.xlane.f32.xlu0 %v436
        %v438 = vpop.xlane.xlu0 %437
        %v439 = vcvt.f32.s32 %v438
        %v440 = vcvt.f32.s32 %v434
        %v441 = vshll.u32 %v440, 16
        %v442 = vadd.s32 %v441, %v439
        %vm443 = vcmp.eq.s32.totalorder %v427, 0
        %vm444 = vcmp.eq.s32.totalorder %v427, 1
        %v445 = vsel %vm444, %v442, 0
        %v446 = vsel %vm443, %v425, %v445
        %447 = vst [vmem:[%s363] sm:$0xff] %v446
        %v448 = vld [vmem:[%s388] sm:$0xff]
        %v449 = vld [vmem:[%s392] sm:$0xf]
        %v450 = vmul.f32 %v448, 0.5
        %452 = vrot.lane.b32.xlu0 %v450, 126
        %v453 = vpop.permute.xlu0 %452
        %v455 = vsub.f32 %v448, %v453
        %v456 = vadd.f32 %v448, %v453
        %v457 = vmul.f32 %v449, 0.5
        %v459 = vrot.slane %v457, 2
        %v461 = vsub.f32 %v449, %v459
        %v462 = vadd.f32 %v449, %v459
        %v463 = vsub.f32 %v456, %v455
        %465 = vrot.lane.b32.xlu0 %v463, 127
        %v466 = vpop.permute.xlu0 %465
        %v468 = vmul.f32 %v463, %v466
        %v469 = vsub.f32 %v462, %v461
        %v471 = vrot.slane %v469, 1
        %v473 = vmul.f32 %v469, %v471
        %475 = vset.pattern.permute.xlu0 0
        %476 = vperm.xlu0 %475, %v456
        %v477 = vpop.permute.xlu0 %476
        %v479 = vlaneseq
        %v480 = vshrl.u32 %v479, 7
        %v481 = vsub.s32 0, %v480
        %v482 = vrot.slane %v462, %v481
        %v483 = vmin.f32 %v477, %v482
        %485 = vset.pattern.permute.xlu0 0
        %486 = vperm.xlu0 %485, %v455
        %v487 = vpop.permute.xlu0 %486
        %v489 = vlaneseq
        %v490 = vshrl.u32 %v489, 7
        %v491 = vsub.s32 0, %v490
        %v492 = vrot.slane %v461, %v491
        %v493 = vmax.f32 %v487, %v492
        %v494 = vsub.f32 %v483, %v493
        %v495 = vmax.f32 %v494, 0.0
        %496 = vset.pattern.permute.xlu0 1
        %497 = vperm.xlu0 %496, %v456
        %v498 = vpop.permute.xlu0 %497
        %v500 = vlaneseq
        %v501 = vshrl.u32 %v500, 7
        %v502 = vsub.s32 1, %v501
        %v503 = vrot.slane %v462, %v502
        %v504 = vmin.f32 %v498, %v503
        %505 = vset.pattern.permute.xlu0 1
        %506 = vperm.xlu0 %505, %v455
        %v507 = vpop.permute.xlu0 %506
        %v509 = vlaneseq
        %v510 = vshrl.u32 %v509, 7
        %v511 = vsub.s32 1, %v510
        %v512 = vrot.slane %v461, %v511
        %v513 = vmax.f32 %v507, %v512
        %v514 = vsub.f32 %v504, %v513
        %v515 = vmax.f32 %v514, 0.0
        %v516 = vmul.f32 %v495, %v515
        %518 = vset.pattern.permute.xlu0 0
        %519 = vperm.xlu0 %518, %v468
        %v520 = vpop.permute.xlu0 %519
        %v522 = vlaneseq
        %v523 = vshrl.u32 %v522, 7
        %v524 = vsub.s32 0, %v523
        %v525 = vrot.slane %v473, %v524
        %v526 = vadd.f32 %v520, %v525
        %v527 = vsub.f32 %v526, %v516
        %v528 = vmax.f32 %v527, 1e-07
        %v529 = vrcp.pop %v528
        %v530 = vmul.f32 %v516, %v529
        %531 = vst [vmem:[%s370] sm:$0xff] %v530
        %v532 = vld [vmem:[%s396] sm:$0xff]
        %vm533 = vcmp.lt.s32.totalorder %v427, 32
        %v534 = vsel %vm533, %v532, 0.0
        %535 = vadd.xlane.f32.xlu0 %v534
        %v536 = vpop.xlane.xlu0 %535
        %v537 = vrcp.pop 32.0
        %v538 = vmul.f32 %v536, %v537
        %v539 = vsub.f32 %v532, %v538
        %v540 = vsel %vm533, %v539, 0.0
        %v541 = vmul.f32 %v540, %v540
        %542 = vadd.xlane.f32.xlu0 %v541
        %v543 = vpop.xlane.xlu0 %542
        %v544 = vrcp.pop 31.0
        %v545 = vmul.f32 %v543, %v544
        %v546 = vrsqrt.pop %v545
        %v547 = vmul.f32 %v545, %v546
        %vm548 = vcmp.eq.f32.partialorder %v545, inf
        %v549 = vsel %vm548, %v545, %v547
        %vm550 = vcmp.eq.f32.partialorder %v545, 0.0
        %v551 = vand.u32 %v545, 2147483648
        %v552 = vsel %vm550, %v551, %v549
        %v553 = vld [vmem:[%s400] sm:$0xff]
        %v554 = vmul.f32 %v553, %v552
        %v555 = vmul.f32 %v554, 0.1
        %v556 = vadd.f32 %v532, %v555
        %557 = vst [vmem:[%s377] sm:$0xff] %v556
        %s558 = sand.u32 %s190, 1
        %s559 = scalar_lea.sflag [#allocation3], %s558
        %s560 = sand.u32 %s190, 1
        %s561 = smul.addr %s560, 8
        %s562 = scalar_lea.vmem [#allocation2], %s561
        %s563 = sand.u32 %s26, 1
        %s564 = scalar_lea.sflag [#allocation5], %s563
        %s565 = sand.u32 %s216, 1
        %s566 = smul.addr %s565, 8
        %s567 = scalar_lea.vmem [#allocation4], %s566
        %s568 = sand.u32 %s26, 1
        %s569 = scalar_lea.sflag [#allocation5], %s568
        %s570 = sand.u32 %s242, 1
        %s571 = smul.addr %s570, 8
        %s572 = scalar_lea.vmem [#allocation6], %s571
        // Predicated region
        $region45: #{fn.1} parent=43 // pred_check
          %p573 = pneg %p200
        $region46: #{fn.1} parent=43 // pred_check_branch
          %575 = sbr.rel (%p573) target = $region48
        $region47: #{fn.1} parent=43 // pred_region
          %s577 = ssub.s32 128, 128
          %578 = vsyncadd %s559, %s577
          %s579 = smul.addr %s26, 128
          %s580 = scalar_lea.hbm %s6, %s579
          %s582 = sshll.u32 %s562, 4
          %s583 = int_to_ptr.vmem [resolvable:$true] %s582
          %585 = dma.vmem_to_hbm [thread:$0]  %s583, 128, %s580, %s559
        $region48: #{fn.1} parent=43 // pred_fallthru
          _
        // Predicated region
        $region49: #{fn.1} parent=43 // pred_check
          %p586 = pneg %p226
        $region50: #{fn.1} parent=43 // pred_check_branch
          %588 = sbr.rel (%p586) target = $region52
        $region51: #{fn.1} parent=43 // pred_region
          %s590 = ssub.s32 128, 128
          %591 = vsyncadd %s564, %s590
          %s592 = smul.addr %s26, 128
          %s593 = scalar_lea.hbm %s7, %s592
          %s595 = sshll.u32 %s567, 4
          %s596 = int_to_ptr.vmem [resolvable:$true] %s595
          %598 = dma.vmem_to_hbm [thread:$0]  %s596, 128, %s593, %s564
        $region52: #{fn.1} parent=43 // pred_fallthru
          _
        // Predicated region
        $region53: #{fn.1} parent=43 // pred_check
          %p599 = pneg %p252
        $region54: #{fn.1} parent=43 // pred_check_branch
          %601 = sbr.rel (%p599) target = $region56
        $region55: #{fn.1} parent=43 // pred_region
          %s603 = ssub.s32 128, 128
          %604 = vsyncadd %s569, %s603
          %s605 = smul.addr %s26, 128
          %s606 = scalar_lea.hbm %s8, %s605
          %s608 = sshll.u32 %s572, 4
          %s609 = int_to_ptr.vmem [resolvable:$true] %s608
          %611 = dma.vmem_to_hbm [thread:$0]  %s609, 128, %s606, %s569
        $region56: #{fn.1} parent=43 // pred_fallthru
          _
      $region44: #{fn.1} parent=5 // pred_fallthru
        _
      %p612 = scmp.le.s32.totalorder 2, %s21
      // Predicated region
      $region57: #{fn.1} parent=5 // pred_check
        %p613 = pneg %p612
      $region58: #{fn.1} parent=5 // pred_check_branch
        %615 = sbr.rel (%p613) target = $region60
      $region59: #{fn.1} parent=5 // pred_region
        %s616 = ssub.s32 %s21, 2
        // Predicated region
        $region61: #{fn.1} parent=59 // pred_check
          %p617 = pneg %p206
        $region62: #{fn.1} parent=59 // pred_check_branch
          %619 = sbr.rel (%p617) target = $region64
        $region63: #{fn.1} parent=59 // pred_region
          %s620 = sand.u32 %s191, 1
          %s621 = scalar_lea.sflag [#allocation3], %s620
          %s622 = sand.u32 %s191, 1
          %s623 = smul.addr %s622, 8
          %s624 = scalar_lea.vmem [#allocation2], %s623
          %625 = dma.done %s621, 128
        $region64: #{fn.1} parent=59 // pred_fallthru
          _
        // Predicated region
        $region65: #{fn.1} parent=59 // pred_check
          %p626 = pneg %p232
        $region66: #{fn.1} parent=59 // pred_check_branch
          %628 = sbr.rel (%p626) target = $region68
        $region67: #{fn.1} parent=59 // pred_region
          %s629 = sand.u32 %s27, 1
          %s630 = scalar_lea.sflag [#allocation5], %s629
          %s631 = sand.u32 %s217, 1
          %s632 = smul.addr %s631, 8
          %s633 = scalar_lea.vmem [#allocation4], %s632
          %634 = dma.done %s630, 128
        $region68: #{fn.1} parent=59 // pred_fallthru
          _
        // Predicated region
        $region69: #{fn.1} parent=59 // pred_check
          %p635 = pneg %p258
        $region70: #{fn.1} parent=59 // pred_check_branch
          %637 = sbr.rel (%p635) target = $region72
        $region71: #{fn.1} parent=59 // pred_region
          %s638 = sand.u32 %s27, 1
          %s639 = scalar_lea.sflag [#allocation5], %s638
          %s640 = sand.u32 %s243, 1
          %s641 = smul.addr %s640, 8
          %s642 = scalar_lea.vmem [#allocation6], %s641
          %643 = dma.done %s639, 128
        $region72: #{fn.1} parent=59 // pred_fallthru
          _
      $region60: #{fn.1} parent=5 // pred_fallthru
        _
    $region6: #{fn.1} parent=1 // loop_footer
      %s25 = sadd.s32 1, %s21
    $region7: #{fn.1} parent=1 // loop_footer_branch
      %20 = sbr.rel target = $region3
    $region8: #{fn.1} parent=1 // loop_exit
      _
    %644 = vsyncpa [#allocation3], 1
    %s645 = scalar_lea.sflag [#allocation3], 1
    %646 = vsyncpa %s645, 1
    %647 = vsyncpa [#allocation5], 1
    %s648 = scalar_lea.sflag [#allocation5], 1
    %649 = vsyncpa %s648, 1

</llo_original>
